<compile_context>
chip_gen: v5e
topology: v5e:2x2
jax: 0.10.0
libtpu: 0.0.40
codegen_flags: <defaults>
</compile_context>

<pallas_src>
import functools

import jax
import jax.numpy as jnp
from jax.experimental import pallas as pl
from jax.experimental.pallas import tpu as pltpu


def _dilated_res_block_kernel(
    W, f0,
    x_ref,     # (Cin, LW)     bf16 input: channels on sublanes, Nb*H*W on lanes
    w1p_ref,   # (f0+f2, Cin)  bf16 BN-scaled conv1 + projection weights, stacked
    b1_ref,    # (f0, 1)       f32  BN1 shift
    w2_ref,    # (f1, 9*f0)    bf16 BN-scaled dilated-3x3 weights, K-fused
    b2_ref,    # (f1, 1)       f32  BN2 shift
    w3_ref,    # (f2, f1)      bf16 BN-scaled conv3 weights
    bo_ref,    # (f2, 1)       f32  BN3 shift + projection-BN shift (pre-summed)
    mask_ref,  # (9, LW)       f32  precomputed dilated-3x3 boundary masks
    o_ref,     # (f2, LW)      f32  output
    stk_ref,   # (9*f0, LW)    f32  VMEM scratch for the stacked masked taps
):
    LW = x_ref.shape[1]

    # ---- conv1 (1x1) and projection (1x1) fused into one wide MXU push -----
    t = jnp.dot(w1p_ref[...], x_ref[...], preferred_element_type=jnp.float32)
    t1 = jnp.maximum(t[:f0] + b1_ref[...], 0.0)    # (f0, LW)  BN1 + ReLU, f32
    o_ref[...] = t[f0:]                            # park scaled shortcut in VMEM

    # ---- conv2: 3x3, dilation=2, padding=2 ('same') -------------------------
    # 9 taps via lane rolls + precomputed boundary masks (multiplies, not
    # selects), written straight into the VMEM scratch (f0 % 8 == 0 keeps the
    # f32 row writes on sublane-tile boundaries).
    tap = 0
    for ky in range(3):
        dy = 2 * (ky - 1)
        for kx in range(3):
            dx = 2 * (kx - 1)
            off = dy * W + dx
            rolled = t1 if off == 0 else pltpu.roll(t1, (-off) % LW, axis=1)
            stk_ref[tap * f0:(tap + 1) * f0, :] = rolled * mask_ref[tap:tap + 1, :]
            tap += 1

    # Single K-fused contraction, bf16 MXU inputs, f32 accumulate.
    t2 = jnp.dot(w2_ref[...], stk_ref[...].astype(jnp.bfloat16),
                 preferred_element_type=jnp.float32)
    t2 = jnp.maximum(t2 + b2_ref[...], 0.0)        # (f1, LW)  BN2 + ReLU, f32

    # ---- conv3 (1x1) + residual add + ReLU ----------------------------------
    y = jnp.dot(w3_ref[...], t2.astype(jnp.bfloat16),
                preferred_element_type=jnp.float32)
    o_ref[...] = jnp.maximum(y + o_ref[...] + bo_ref[...], 0.0).astype(o_ref.dtype)


def _plan_batching(N, HW, target_lanes=2048):
    """Pick (images per grid step, number of grid steps).

    Keep >= 2 grid steps when N >= 2 (v7x has 2 TensorCores; a 1-step grid
    leaves one idle) while folding enough images into the lane axis that each
    MXU push streams ~target_lanes columns.
    """
    if N <= 1:
        return 1, 1
    nb_cap = max(1, target_lanes // HW)
    steps = max(2, pl.cdiv(N, nb_cap))
    nb = pl.cdiv(N, steps)
    steps = pl.cdiv(N, nb)
    if steps > 1 and (nb * HW) % 128 != 0:
        # Lane block must be 128-divisible unless it spans the whole array.
        return N, 1
    return nb, steps


@jax.jit
def dilated_res_block_proj(x_nchw, params):
    """x_nchw: (N, Cin, H, W) float32. Returns (N, f2, H, W)."""
    N, Cin, H, W = x_nchw.shape
    f0 = params["w1"].shape[1]
    f1 = params["w2"].shape[3]
    f2 = params["w3"].shape[1]
    HW = H * W

    # Sublane-alignment guard: the t[:f0]/t[f0:] split and the tap stacking are
    # copy-free only when they land on sublane-tile boundaries (8 rows in f32;
    # 16 preferred once bf16 intermediates are stacked directly).
    assert f0 % 8 == 0 and f1 % 8 == 0 and f2 % 8 == 0, \
        "filters_list entries must be multiples of 8 for copy-free tiling"

    nb, steps = _plan_batching(N, HW)
    ntot = nb * steps
    lw = nb * HW

    # NCHW -> (N, Cin, HW) (metadata reshape), pad batch to nb*steps, then one
    # XLA transpose+cast to the lane-major bf16 layout (Cin, ntot*HW).
    x_flat = x_nchw.reshape(N, Cin, HW)
    if ntot != N:
        x_flat = jnp.pad(x_flat, ((0, ntot - N), (0, 0), (0, 0)))
    x_lanes = jnp.transpose(x_flat, (1, 0, 2)).reshape(Cin, ntot * HW)
    x_lanes = x_lanes.astype(jnp.bfloat16)

    # Fold BN scales into (transposed) conv weights at trace time; bf16 MXU
    # operands, f32 shifts.
    s1 = params["s1"].reshape(f0, 1)
    s2 = params["s2"].reshape(f1, 1)
    s3 = params["s3"].reshape(f2, 1)
    sp = params["sp"].reshape(f2, 1)
    w1p = jnp.concatenate(
        [params["w1"].T * s1, params["wp"].T * sp], axis=0).astype(jnp.bfloat16)
    w2t = (jnp.transpose(params["w2"], (3, 0, 1, 2))
           .reshape(f1, 9 * f0) * s2).astype(jnp.bfloat16)
    w3t = (params["w3"].T * s3).astype(jnp.bfloat16)
    b1 = params["b1"].reshape(f0, 1).astype(jnp.float32)
    b2 = params["b2"].reshape(f1, 1).astype(jnp.float32)
    bo = (params["b3"] + params["bp"]).reshape(f2, 1).astype(jnp.float32)

    # Precompute the 9 dilated-3x3 boundary masks once (they also neutralize
    # cross-image wrap from the lane rolls when nb > 1).
    lane = jnp.arange(HW, dtype=jnp.int32)
    h_idx = lane // W
    w_idx = lane % W
    rows = []
    for ky in range(3):
        dy = 2 * (ky - 1)
        for kx in range(3):
            dx = 2 * (kx - 1)
            valid = ((h_idx + dy >= 0) & (h_idx + dy < H)
                     & (w_idx + dx >= 0) & (w_idx + dx < W))
            rows.append(valid.astype(jnp.float32))
    mask = jnp.tile(jnp.stack(rows, axis=0), (1, nb))        # (9, lw)

    def _rep(shape):  # full (untiled) block, same for every grid step
        nd = len(shape)
        return pl.BlockSpec(shape, lambda g, _nd=nd: (0,) * _nd)

    grid_spec = pltpu.PrefetchScalarGridSpec(
        num_scalar_prefetch=0,
        grid=(steps,),
        in_specs=[
            pl.BlockSpec((Cin, lw), lambda g: (0, g)),
            _rep(w1p.shape),
            _rep(b1.shape),
            _rep(w2t.shape),
            _rep(b2.shape),
            _rep(w3t.shape),
            _rep(bo.shape),
            _rep(mask.shape),
        ],
        out_specs=pl.BlockSpec((f2, lw), lambda g: (0, g)),
        scratch_shapes=[pltpu.VMEM((9 * f0, lw), jnp.float32)],
    )

    flops = 2 * (Cin * (f0 + f2) + 9 * f0 * f1 + f1 * f2) * HW * N
    bytes_accessed = (x_lanes.size * 2 + f2 * ntot * HW * 4 + mask.size * 4
                      + w1p.size * 2 + w2t.size * 2 + w3t.size * 2
                      + (f0 + f1 + f2) * 4)

    # Per-step VMEM live-set estimate; raise the scoped limit only when needed.
    est_vmem = (2 * Cin * lw * 2          # x block, double-buffered, bf16
                + 2 * f2 * lw * 4         # out block, double-buffered, f32
                + 9 * f0 * lw * 4         # stacked-tap scratch, f32
                + 9 * lw * 4              # boundary masks
                + (2 * f0 + f1 + f2) * lw * 4)   # live f32 intermediates
    vmem_limit = int(min(96 << 20, 2 * est_vmem)) if est_vmem > (8 << 20) else None
    # TODO(synk): for large H*W (v7x has only 64 MiB VMEM) add an H-strip grid
    # axis with a 2-row halo instead of whole-image lane blocks.

    out_lanes = pl.pallas_call(
        functools.partial(_dilated_res_block_kernel, W, f0),
        out_shape=jax.ShapeDtypeStruct((f2, ntot * HW), jnp.float32),
        grid_spec=grid_spec,
        compiler_params=pltpu.CompilerParams(
            dimension_semantics=("parallel",),
            vmem_limit_bytes=vmem_limit),
        cost_estimate=pl.CostEstimate(flops=int(flops), transcendentals=0,
                                      bytes_accessed=int(bytes_accessed)),
    )(x_lanes, w1p, b1, w2t, b2, w3t, bo, mask)

    out = (out_lanes.reshape(f2, ntot, HW)
           .transpose(1, 0, 2)[:N]
           .reshape(N, f2, H, W))
    return out.astype(x_nchw.dtype)


# ----------------------------- reference (pure JAX) --------------------------
def _reference_nhwc(x_nhwc, p):
    dn = ("NHWC", "HWIO", "NHWC")

    def conv1x1(x, w):  # w: (Cin, Cout)
        return jax.lax.conv_general_dilated(
            x, w[None, None], (1, 1), "VALID", dimension_numbers=dn)

    t = conv1x1(x_nhwc, p["w1"])
    t = jax.nn.relu(t * p["s1"] + p["b1"])
    t = jax.lax.conv_general_dilated(
        t, p["w2"], (1, 1), ((2, 2), (2, 2)),
        rhs_dilation=(2, 2), dimension_numbers=dn)
    t = jax.nn.relu(t * p["s2"] + p["b2"])
    t = conv1x1(t, p["w3"])
    t = t * p["s3"] + p["b3"]
    s = conv1x1(x_nhwc, p["wp"])
    s = s * p["sp"] + p["bp"]
    return jax.nn.relu(t + s)


def _make_bn(key, c, eps=1e-5):
    k1, k2, k3, k4 = jax.random.split(key, 4)
    gamma = 1.0 + 0.1 * jax.random.normal(k1, (c,), jnp.float32)
    beta = 0.1 * jax.random.normal(k2, (c,), jnp.float32)
    mean = 0.1 * jax.random.normal(k3, (c,), jnp.float32)
    var = jnp.abs(jax.random.normal(k4, (c,), jnp.float32)) + 0.5
    scale = gamma / jnp.sqrt(var + eps)
    shift = beta - mean * scale
    return scale.reshape(1, c), shift.reshape(1, c)


def _check(x, params, atol, rtol):
    out = jax.block_until_ready(dilated_res_block_proj(x, params))
    ref = _reference_nhwc(jnp.transpose(x, (0, 2, 3, 1)), params)
    ref = jnp.transpose(ref, (0, 3, 1, 2))
    assert out.shape == ref.shape
    assert bool(jnp.allclose(out, ref, atol=atol, rtol=rtol)), (
        float(jnp.max(jnp.abs(out - ref))))
    return out


if __name__ == "__main__":
    # Small shapes consistent with the module's forward.
    N, Cin, H, W = 2, 4, 16, 16
    filters_list = [8, 16, 16]          # f1 == f2 required (see module's conv3_b)
    f0, f1, f2 = filters_list
    assert f1 == f2, "PyTorch module only runs when filters_list[1] == filters_list[2]"

    key = jax.random.PRNGKey(0)
    keys = jax.random.split(key, 10)

    x = jax.random.normal(keys[0], (N, Cin, H, W), jnp.float32)

    params = {}
    params["w1"] = 0.2 * jax.random.normal(keys[1], (Cin, f0), jnp.float32)
    params["w2"] = 0.1 * jax.random.normal(keys[2], (3, 3, f0, f1), jnp.float32)
    params["w3"] = 0.2 * jax.random.normal(keys[3], (f1, f2), jnp.float32)
    params["wp"] = 0.2 * jax.random.normal(keys[4], (Cin, f2), jnp.float32)
    params["s1"], params["b1"] = _make_bn(keys[5], f0)
    params["s2"], params["b2"] = _make_bn(keys[6], f1)
    params["s3"], params["b3"] = _make_bn(keys[7], f2)
    params["sp"], params["bp"] = _make_bn(keys[8], f2)

    # Main check (N=2 -> nb=1, 2 parallel grid steps).  bf16 MXU inputs ->
    # looser tolerance than the previous all-f32 version.
    _check(x, params, atol=5e-2, rtol=5e-2)

    # Secondary check: exercises multi-image lane folding + batch padding
    # (N=5 -> nb=3 images per step, 2 steps, 1 padded image sliced away).
    x2 = jax.random.normal(keys[9], (5, Cin, H, W), jnp.float32)
    _check(x2, params, atol=5e-2, rtol=5e-2)

    print("KERNEL_OK")
</pallas_src>

<mosaic_0001>
module attributes {stable_mosaic.version = 11 : i64} {
  func.func @_dilated_res_block_kernel(%arg0: i32, %arg1: memref<4x256xbf16, #tpu.memory_space<vmem>>, %arg2: memref<24x4xbf16, #tpu.memory_space<vmem>>, %arg3: memref<8x1xf32, #tpu.memory_space<vmem>>, %arg4: memref<16x72xbf16, #tpu.memory_space<vmem>>, %arg5: memref<16x1xf32, #tpu.memory_space<vmem>>, %arg6: memref<16x16xbf16, #tpu.memory_space<vmem>>, %arg7: memref<16x1xf32, #tpu.memory_space<vmem>>, %arg8: memref<9x256xf32, #tpu.memory_space<vmem>>, %arg9: memref<16x256xf32, #tpu.memory_space<vmem>>, %arg10: memref<72x256xf32, #tpu.memory_space<vmem>>) attributes {dimension_semantics = [#tpu.dimension_semantics<parallel>], iteration_bounds = array<i64: 2>, scalar_prefetch = 0 : i64, scratch_operands = 1 : i64, tpu.core_type = #tpu.core_type<tc>, window_params = [{transform_indices = @transform_0, window_bounds = array<i64: 4, 256>}, {pipeline_mode = #tpu.pipeline_mode<synchronous>, transform_indices = @transform_1, window_bounds = array<i64: 24, 4>}, {pipeline_mode = #tpu.pipeline_mode<synchronous>, transform_indices = @transform_2, window_bounds = array<i64: 8, 1>}, {pipeline_mode = #tpu.pipeline_mode<synchronous>, transform_indices = @transform_3, window_bounds = array<i64: 16, 72>}, {pipeline_mode = #tpu.pipeline_mode<synchronous>, transform_indices = @transform_4, window_bounds = array<i64: 16, 1>}, {pipeline_mode = #tpu.pipeline_mode<synchronous>, transform_indices = @transform_5, window_bounds = array<i64: 16, 16>}, {pipeline_mode = #tpu.pipeline_mode<synchronous>, transform_indices = @transform_6, window_bounds = array<i64: 16, 1>}, {pipeline_mode = #tpu.pipeline_mode<synchronous>, transform_indices = @transform_7, window_bounds = array<i64: 9, 256>}, {transform_indices = @transform_8, window_bounds = array<i64: 16, 256>}]} {
    %c0 = arith.constant 0 : index
    %c0_0 = arith.constant 0 : index
    %0 = vector.load %arg2[%c0, %c0_0] : memref<24x4xbf16, #tpu.memory_space<vmem>>, vector<24x4xbf16>
    %c0_1 = arith.constant 0 : index
    %c0_2 = arith.constant 0 : index
    %1 = vector.load %arg1[%c0_1, %c0_2] : memref<4x256xbf16, #tpu.memory_space<vmem>>, vector<4x256xbf16>
    %cst = arith.constant dense<0.000000e+00> : vector<24x256xf32>
    %2 = tpu.matmul %0, %1, %cst {dimension_numbers = #tpu.dot_dimension_numbers<[1], [0], [0], [1], [0, 0, 1, 1], [], []>} : vector<24x4xbf16>, vector<4x256xbf16>, vector<24x256xf32> -> vector<24x256xf32>
    %3 = vector.extract_strided_slice %2 {offsets = [0, 0], sizes = [8, 256], strides = [1, 1]} : vector<24x256xf32> to vector<8x256xf32>
    %c0_3 = arith.constant 0 : index
    %c0_4 = arith.constant 0 : index
    %4 = vector.load %arg3[%c0_3, %c0_4] : memref<8x1xf32, #tpu.memory_space<vmem>>, vector<8x1xf32>
    %5 = vector.broadcast %4 : vector<8x1xf32> to vector<8x256xf32>
    %6 = arith.addf %3, %5 : vector<8x256xf32>
    %cst_5 = arith.constant 0.000000e+00 : f32
    %7 = vector.broadcast %cst_5 : f32 to vector<8x256xf32>
    %8 = arith.maximumf %6, %7 : vector<8x256xf32>
    %9 = vector.extract_strided_slice %2 {offsets = [8, 0], sizes = [16, 256], strides = [1, 1]} : vector<24x256xf32> to vector<16x256xf32>
    %c0_6 = arith.constant 0 : index
    %c0_7 = arith.constant 0 : index
    %10 = vector.load %arg9[%c0_6, %c0_7] : memref<16x256xf32, #tpu.memory_space<vmem>>, vector<16x256xf32>
    tpu.vector_store %arg9[%c0_6, %c0_7], %9 {strides = array<i32>} : memref<16x256xf32, #tpu.memory_space<vmem>>, vector<16x256xf32>,
    %c34_i32 = arith.constant 34 : i32
    %11 = tpu.dynamic_rotate %8 by %c34_i32 dim 1 : vector<8x256xf32>, i32 -> vector<8x256xf32>
    %c0_8 = arith.constant 0 : index
    %c0_9 = arith.constant 0 : index
    %12 = vector.load %arg8[%c0_8, %c0_9] : memref<9x256xf32, #tpu.memory_space<vmem>>, vector<1x256xf32>
    %13 = vector.broadcast %12 : vector<1x256xf32> to vector<8x256xf32>
    %14 = arith.mulf %11, %13 : vector<8x256xf32>
    %c0_10 = arith.constant 0 : index
    %c0_11 = arith.constant 0 : index
    %15 = vector.load %arg10[%c0_10, %c0_11] : memref<72x256xf32, #tpu.memory_space<vmem>>, vector<8x256xf32>
    tpu.vector_store %arg10[%c0_10, %c0_11], %14 {strides = array<i32>} : memref<72x256xf32, #tpu.memory_space<vmem>>, vector<8x256xf32>,
    %c32_i32 = arith.constant 32 : i32
    %16 = tpu.dynamic_rotate %8 by %c32_i32 dim 1 : vector<8x256xf32>, i32 -> vector<8x256xf32>
    %c1 = arith.constant 1 : index
    %c0_12 = arith.constant 0 : index
    %17 = vector.load %arg8[%c1, %c0_12] : memref<9x256xf32, #tpu.memory_space<vmem>>, vector<1x256xf32>
    %18 = vector.broadcast %17 : vector<1x256xf32> to vector<8x256xf32>
    %19 = arith.mulf %16, %18 : vector<8x256xf32>
    %c8 = arith.constant 8 : index
    %c0_13 = arith.constant 0 : index
    %20 = vector.load %arg10[%c8, %c0_13] : memref<72x256xf32, #tpu.memory_space<vmem>>, vector<8x256xf32>
    tpu.vector_store %arg10[%c8, %c0_13], %19 {strides = array<i32>} : memref<72x256xf32, #tpu.memory_space<vmem>>, vector<8x256xf32>,
    %c30_i32 = arith.constant 30 : i32
    %21 = tpu.dynamic_rotate %8 by %c30_i32 dim 1 : vector<8x256xf32>, i32 -> vector<8x256xf32>
    %c2 = arith.constant 2 : index
    %c0_14 = arith.constant 0 : index
    %22 = vector.load %arg8[%c2, %c0_14] : memref<9x256xf32, #tpu.memory_space<vmem>>, vector<1x256xf32>
    %23 = vector.broadcast %22 : vector<1x256xf32> to vector<8x256xf32>
    %24 = arith.mulf %21, %23 : vector<8x256xf32>
    %c16 = arith.constant 16 : index
    %c0_15 = arith.constant 0 : index
    %25 = vector.load %arg10[%c16, %c0_15] : memref<72x256xf32, #tpu.memory_space<vmem>>, vector<8x256xf32>
    tpu.vector_store %arg10[%c16, %c0_15], %24 {strides = array<i32>} : memref<72x256xf32, #tpu.memory_space<vmem>>, vector<8x256xf32>,
    %c2_i32 = arith.constant 2 : i32
    %26 = tpu.dynamic_rotate %8 by %c2_i32 dim 1 : vector<8x256xf32>, i32 -> vector<8x256xf32>
    %c3 = arith.constant 3 : index
    %c0_16 = arith.constant 0 : index
    %27 = vector.load %arg8[%c3, %c0_16] : memref<9x256xf32, #tpu.memory_space<vmem>>, vector<1x256xf32>
    %28 = vector.broadcast %27 : vector<1x256xf32> to vector<8x256xf32>
    %29 = arith.mulf %26, %28 : vector<8x256xf32>
    %c24 = arith.constant 24 : index
    %c0_17 = arith.constant 0 : index
    %30 = vector.load %arg10[%c24, %c0_17] : memref<72x256xf32, #tpu.memory_space<vmem>>, vector<8x256xf32>
    tpu.vector_store %arg10[%c24, %c0_17], %29 {strides = array<i32>} : memref<72x256xf32, #tpu.memory_space<vmem>>, vector<8x256xf32>,
    %c4 = arith.constant 4 : index
    %c0_18 = arith.constant 0 : index
    %31 = vector.load %arg8[%c4, %c0_18] : memref<9x256xf32, #tpu.memory_space<vmem>>, vector<1x256xf32>
    %32 = vector.broadcast %31 : vector<1x256xf32> to vector<8x256xf32>
    %33 = arith.mulf %8, %32 : vector<8x256xf32>
    %c32 = arith.constant 32 : index
    %c0_19 = arith.constant 0 : index
    %34 = vector.load %arg10[%c32, %c0_19] : memref<72x256xf32, #tpu.memory_space<vmem>>, vector<8x256xf32>
    tpu.vector_store %arg10[%c32, %c0_19], %33 {strides = array<i32>} : memref<72x256xf32, #tpu.memory_space<vmem>>, vector<8x256xf32>,
    %c254_i32 = arith.constant 254 : i32
    %35 = tpu.dynamic_rotate %8 by %c254_i32 dim 1 : vector<8x256xf32>, i32 -> vector<8x256xf32>
    %c5 = arith.constant 5 : index
    %c0_20 = arith.constant 0 : index
    %36 = vector.load %arg8[%c5, %c0_20] : memref<9x256xf32, #tpu.memory_space<vmem>>, vector<1x256xf32>
    %37 = vector.broadcast %36 : vector<1x256xf32> to vector<8x256xf32>
    %38 = arith.mulf %35, %37 : vector<8x256xf32>
    %c40 = arith.constant 40 : index
    %c0_21 = arith.constant 0 : index
    %39 = vector.load %arg10[%c40, %c0_21] : memref<72x256xf32, #tpu.memory_space<vmem>>, vector<8x256xf32>
    tpu.vector_store %arg10[%c40, %c0_21], %38 {strides = array<i32>} : memref<72x256xf32, #tpu.memory_space<vmem>>, vector<8x256xf32>,
    %c226_i32 = arith.constant 226 : i32
    %40 = tpu.dynamic_rotate %8 by %c226_i32 dim 1 : vector<8x256xf32>, i32 -> vector<8x256xf32>
    %c6 = arith.constant 6 : index
    %c0_22 = arith.constant 0 : index
    %41 = vector.load %arg8[%c6, %c0_22] : memref<9x256xf32, #tpu.memory_space<vmem>>, vector<1x256xf32>
    %42 = vector.broadcast %41 : vector<1x256xf32> to vector<8x256xf32>
    %43 = arith.mulf %40, %42 : vector<8x256xf32>
    %c48 = arith.constant 48 : index
    %c0_23 = arith.constant 0 : index
    %44 = vector.load %arg10[%c48, %c0_23] : memref<72x256xf32, #tpu.memory_space<vmem>>, vector<8x256xf32>
    tpu.vector_store %arg10[%c48, %c0_23], %43 {strides = array<i32>} : memref<72x256xf32, #tpu.memory_space<vmem>>, vector<8x256xf32>,
    %c224_i32 = arith.constant 224 : i32
    %45 = tpu.dynamic_rotate %8 by %c224_i32 dim 1 : vector<8x256xf32>, i32 -> vector<8x256xf32>
    %c7 = arith.constant 7 : index
    %c0_24 = arith.constant 0 : index
    %46 = vector.load %arg8[%c7, %c0_24] : memref<9x256xf32, #tpu.memory_space<vmem>>, vector<1x256xf32>
    %47 = vector.broadcast %46 : vector<1x256xf32> to vector<8x256xf32>
    %48 = arith.mulf %45, %47 : vector<8x256xf32>
    %c56 = arith.constant 56 : index
    %c0_25 = arith.constant 0 : index
    %49 = vector.load %arg10[%c56, %c0_25] : memref<72x256xf32, #tpu.memory_space<vmem>>, vector<8x256xf32>
    tpu.vector_store %arg10[%c56, %c0_25], %48 {strides = array<i32>} : memref<72x256xf32, #tpu.memory_space<vmem>>, vector<8x256xf32>,
    %c222_i32 = arith.constant 222 : i32
    %50 = tpu.dynamic_rotate %8 by %c222_i32 dim 1 : vector<8x256xf32>, i32 -> vector<8x256xf32>
    %c8_26 = arith.constant 8 : index
    %c0_27 = arith.constant 0 : index
    %51 = vector.load %arg8[%c8_26, %c0_27] : memref<9x256xf32, #tpu.memory_space<vmem>>, vector<1x256xf32>
    %52 = vector.broadcast %51 : vector<1x256xf32> to vector<8x256xf32>
    %53 = arith.mulf %50, %52 : vector<8x256xf32>
    %c64 = arith.constant 64 : index
    %c0_28 = arith.constant 0 : index
    %54 = vector.load %arg10[%c64, %c0_28] : memref<72x256xf32, #tpu.memory_space<vmem>>, vector<8x256xf32>
    tpu.vector_store %arg10[%c64, %c0_28], %53 {strides = array<i32>} : memref<72x256xf32, #tpu.memory_space<vmem>>, vector<8x256xf32>,
    %c0_29 = arith.constant 0 : index
    %c0_30 = arith.constant 0 : index
    %55 = vector.load %arg4[%c0_29, %c0_30] : memref<16x72xbf16, #tpu.memory_space<vmem>>, vector<16x72xbf16>
    %c0_31 = arith.constant 0 : index
    %c0_32 = arith.constant 0 : index
    %56 = vector.load %arg10[%c0_31, %c0_32] : memref<72x256xf32, #tpu.memory_space<vmem>>, vector<72x256xf32>
    %57 = arith.truncf %56 : vector<72x256xf32> to vector<72x256xbf16>
    %cst_33 = arith.constant dense<0.000000e+00> : vector<16x256xf32>
    %58 = tpu.matmul %55, %57, %cst_33 {dimension_numbers = #tpu.dot_dimension_numbers<[1], [0], [0], [1], [0, 0, 1, 1], [], []>} : vector<16x72xbf16>, vector<72x256xbf16>, vector<16x256xf32> -> vector<16x256xf32>
    %c0_34 = arith.constant 0 : index
    %c0_35 = arith.constant 0 : index
    %59 = vector.load %arg5[%c0_34, %c0_35] : memref<16x1xf32, #tpu.memory_space<vmem>>, vector<16x1xf32>
    %60 = vector.broadcast %59 : vector<16x1xf32> to vector<16x256xf32>
    %61 = arith.addf %58, %60 : vector<16x256xf32>
    %cst_36 = arith.constant 0.000000e+00 : f32
    %62 = vector.broadcast %cst_36 : f32 to vector<16x256xf32>
    %63 = arith.maximumf %61, %62 : vector<16x256xf32>
    %c0_37 = arith.constant 0 : index
    %c0_38 = arith.constant 0 : index
    %64 = vector.load %arg6[%c0_37, %c0_38] : memref<16x16xbf16, #tpu.memory_space<vmem>>, vector<16x16xbf16>
    %65 = arith.truncf %63 : vector<16x256xf32> to vector<16x256xbf16>
    %cst_39 = arith.constant dense<0.000000e+00> : vector<16x256xf32>
    %66 = tpu.matmul %64, %65, %cst_39 {dimension_numbers = #tpu.dot_dimension_numbers<[1], [0], [0], [1], [0, 0, 1, 1], [], []>} : vector<16x16xbf16>, vector<16x256xbf16>, vector<16x256xf32> -> vector<16x256xf32>
    %c0_40 = arith.constant 0 : index
    %c0_41 = arith.constant 0 : index
    %67 = vector.load %arg9[%c0_40, %c0_41] : memref<16x256xf32, #tpu.memory_space<vmem>>, vector<16x256xf32>
    %68 = arith.addf %66, %67 : vector<16x256xf32>
    %c0_42 = arith.constant 0 : index
    %c0_43 = arith.constant 0 : index
    %69 = vector.load %arg7[%c0_42, %c0_43] : memref<16x1xf32, #tpu.memory_space<vmem>>, vector<16x1xf32>
    %70 = vector.broadcast %69 : vector<16x1xf32> to vector<16x256xf32>
    %71 = arith.addf %68, %70 : vector<16x256xf32>
    %cst_44 = arith.constant 0.000000e+00 : f32
    %72 = vector.broadcast %cst_44 : f32 to vector<16x256xf32>
    %73 = arith.maximumf %71, %72 : vector<16x256xf32>
    %c0_45 = arith.constant 0 : index
    %c0_46 = arith.constant 0 : index
    %74 = vector.load %arg9[%c0_45, %c0_46] : memref<16x256xf32, #tpu.memory_space<vmem>>, vector<16x256xf32>
    tpu.vector_store %arg9[%c0_45, %c0_46], %73 {strides = array<i32>} : memref<16x256xf32, #tpu.memory_space<vmem>>, vector<16x256xf32>,
    return
  }
  func.func @transform_0(%arg0: i32) -> (i32, i32) {
    %c0_i32 = arith.constant 0 : i32
    %c0_i32_0 = arith.constant 0 : i32
    return %c0_i32, %arg0 : i32, i32
  }
  func.func @transform_1(%arg0: i32) -> (i32, i32) {
    %c0_i32 = arith.constant 0 : i32
    %c0_i32_0 = arith.constant 0 : i32
    %c0_i32_1 = arith.constant 0 : i32
    return %c0_i32, %c0_i32_0 : i32, i32
  }
  func.func @transform_2(%arg0: i32) -> (i32, i32) {
    %c0_i32 = arith.constant 0 : i32
    %c0_i32_0 = arith.constant 0 : i32
    %c0_i32_1 = arith.constant 0 : i32
    return %c0_i32, %c0_i32_0 : i32, i32
  }
  func.func @transform_3(%arg0: i32) -> (i32, i32) {
    %c0_i32 = arith.constant 0 : i32
    %c0_i32_0 = arith.constant 0 : i32
    %c0_i32_1 = arith.constant 0 : i32
    return %c0_i32, %c0_i32_0 : i32, i32
  }
  func.func @transform_4(%arg0: i32) -> (i32, i32) {
    %c0_i32 = arith.constant 0 : i32
    %c0_i32_0 = arith.constant 0 : i32
    %c0_i32_1 = arith.constant 0 : i32
    return %c0_i32, %c0_i32_0 : i32, i32
  }
  func.func @transform_5(%arg0: i32) -> (i32, i32) {
    %c0_i32 = arith.constant 0 : i32
    %c0_i32_0 = arith.constant 0 : i32
    %c0_i32_1 = arith.constant 0 : i32
    return %c0_i32, %c0_i32_0 : i32, i32
  }
  func.func @transform_6(%arg0: i32) -> (i32, i32) {
    %c0_i32 = arith.constant 0 : i32
    %c0_i32_0 = arith.constant 0 : i32
    %c0_i32_1 = arith.constant 0 : i32
    return %c0_i32, %c0_i32_0 : i32, i32
  }
  func.func @transform_7(%arg0: i32) -> (i32, i32) {
    %c0_i32 = arith.constant 0 : i32
    %c0_i32_0 = arith.constant 0 : i32
    %c0_i32_1 = arith.constant 0 : i32
    return %c0_i32, %c0_i32_0 : i32, i32
  }
  func.func @transform_8(%arg0: i32) -> (i32, i32) {
    %c0_i32 = arith.constant 0 : i32
    %c0_i32_0 = arith.constant 0 : i32
    return %c0_i32, %arg0 : i32, i32
  }
}

</mosaic_0001>

<llo_original>
// kernel: dilated_res_block_proj.1
$region0: #{dilated_res_block_proj.1}
  #allocation0 [shape = 'u32[]', space=smem, size = 0x4, offset = 0x4, fixed_abs, tag = 'smem constant byte address 0x4 - core index']
  #allocation1 [shape = 'u32[72,128]{1,0:T(1,128)}', space=vmem, size = 0x9000, scoped, tag = 'internal scratch']
  #allocation2 [shape = 'f32[72,256]{1,0:T(8,128)}', space=vmem, size = 0x12000, scoped, tag = 'scratch operand']
  %s0 = inlined_call_operand.vmem [shape: bf16[4,512], index: 0, kind: input, shape index: {}]
  %s1 = inlined_call_operand.vmem [shape: bf16[24,4], index: 1, kind: input, shape index: {}]
  %s2 = inlined_call_operand.vmem [shape: f32[8,1], index: 2, kind: input, shape index: {}]
  %s3 = inlined_call_operand.vmem [shape: bf16[16,72], index: 3, kind: input, shape index: {}]
  %s4 = inlined_call_operand.vmem [shape: f32[16,1], index: 4, kind: input, shape index: {}]
  %s5 = inlined_call_operand.vmem [shape: bf16[16,16], index: 5, kind: input, shape index: {}]
  %s6 = inlined_call_operand.vmem [shape: f32[16,1], index: 6, kind: input, shape index: {}]
  %s7 = inlined_call_operand.vmem [shape: f32[9,256], index: 7, kind: input, shape index: {}]
  %s8 = inlined_call_operand.vmem [shape: f32[16,512], index: 8, kind: output, shape index: {}]
  %s9 = sld [smem:[#allocation0]]
  $region84: #{dilated_res_block_proj.1} parent=0
    _
  %s11 = ssub.s32 1, %s9
  %s12 = scalar_select 0, %s11, %s9
  $region1: #{dilated_res_block_proj.1} parent=0
    #allocation3 [shape = 'u8[32768]{0}', space=vmem, size = 0x8000, scoped, tag = 'output window, operand 0']
    loop: start=0, step=1, limit=4
    $region2: #{dilated_res_block_proj.1} parent=1 // loop_pre_header
      _
    $region3: #{dilated_res_block_proj.1} parent=1 // loop_header
      %s14 = sphi 0, %s18
      %p15 = scmp.ge.s32.totalorder %s14, 4
      %s24 = sphi 0, %s26
      %s27 = sphi 0, %s24
      %s28 = sphi 0, %s27
      %s44 = sphi 0, %s28
      %s48 = sphi 0, %s48
      %s50 = sphi 0, %s48
      %s51 = sphi 0, %s50
      %s65 = sphi 0, %s51
      %s69 = sphi 0, %s69
      %s71 = sphi 0, %s69
      %s72 = sphi 0, %s71
      %s86 = sphi 0, %s72
      %s90 = sphi 0, %s90
      %s92 = sphi 0, %s90
      %s93 = sphi 0, %s92
      %s107 = sphi 0, %s93
      %s111 = sphi 0, %s111
      %s113 = sphi 0, %s111
      %s114 = sphi 0, %s113
      %s128 = sphi 0, %s114
      %s132 = sphi 0, %s132
      %s134 = sphi 0, %s132
      %s135 = sphi 0, %s134
      %s149 = sphi 0, %s135
      %s153 = sphi 0, %s153
      %s155 = sphi 0, %s153
      %s156 = sphi 0, %s155
      %s170 = sphi 0, %s156
      %s174 = sphi 0, %s174
      %s176 = sphi 0, %s174
      %s177 = sphi 0, %s176
      %s191 = sphi 0, %s177
      %s197 = sphi 0, %s199
      %s200 = sphi 0, %s197
      %s201 = sphi 0, %s200
      %s217 = sphi 0, %s201
    $region4: #{dilated_res_block_proj.1} parent=1 // loop_header_branch
      %17 = sbr.rel (%p15) target = $region8
    $region5: #{dilated_res_block_proj.1} parent=1 // loop_body
      %s19 = ssub.s32 %s14, 1
      %s20 = ssub.s32 %s14, 2
      %s21 = sadd.s32 %s14, 1
      %s22 = ssub.s32 %s14, %s21
      %p23 = scmp.eq.s32.totalorder %s22, 0
      %s25 = sadd.s32 %s24, 1
      %s26 = scalar_select %p23, %s24, %s25
      %p29 = pneg %p23
      %p30 = scmp.eq.s32.totalorder %s14, 1
      %p31 = por %p29, %p30
      %p32 = scmp.ne.s32.totalorder %s24, %s27
      %p33 = scmp.eq.s32.totalorder %s14, 0
      %p34 = por %p32, %p33
      %p35 = scmp.ne.s32.totalorder %s24, %s27
      %p36 = scmp.eq.s32.totalorder %s19, 1
      %p37 = por %p35, %p36
      %p38 = scmp.ne.s32.totalorder %s27, %s28
      %p39 = scmp.eq.s32.totalorder %s19, 0
      %p40 = por %p38, %p39
      %p41 = scmp.ne.s32.totalorder %s27, %s28
      %p42 = scmp.eq.s32.totalorder %s20, 1
      %p43 = por %p41, %p42
      %p45 = scmp.ne.s32.totalorder %s28, %s44
      %p46 = scmp.eq.s32.totalorder %s20, 0
      %p47 = por %p45, %p46
      %s49 = sadd.s32 %s48, 1
      %p52 = scmp.eq.s32.totalorder %s14, 1
      %p53 = scmp.ne.s32.totalorder %s48, %s50
      %p54 = scmp.eq.s32.totalorder %s14, 0
      %p55 = por %p53, %p54
      %p56 = scmp.ne.s32.totalorder %s48, %s50
      %p57 = scmp.eq.s32.totalorder %s19, 1
      %p58 = por %p56, %p57
      %p59 = scmp.ne.s32.totalorder %s50, %s51
      %p60 = scmp.eq.s32.totalorder %s19, 0
      %p61 = por %p59, %p60
      %p62 = scmp.ne.s32.totalorder %s50, %s51
      %p63 = scmp.eq.s32.totalorder %s20, 1
      %p64 = por %p62, %p63
      %p66 = scmp.ne.s32.totalorder %s51, %s65
      %p67 = scmp.eq.s32.totalorder %s20, 0
      %p68 = por %p66, %p67
      %s70 = sadd.s32 %s69, 1
      %p73 = scmp.eq.s32.totalorder %s14, 1
      %p74 = scmp.ne.s32.totalorder %s69, %s71
      %p75 = scmp.eq.s32.totalorder %s14, 0
      %p76 = por %p74, %p75
      %p77 = scmp.ne.s32.totalorder %s69, %s71
      %p78 = scmp.eq.s32.totalorder %s19, 1
      %p79 = por %p77, %p78
      %p80 = scmp.ne.s32.totalorder %s71, %s72
      %p81 = scmp.eq.s32.totalorder %s19, 0
      %p82 = por %p80, %p81
      %p83 = scmp.ne.s32.totalorder %s71, %s72
      %p84 = scmp.eq.s32.totalorder %s20, 1
      %p85 = por %p83, %p84
      %p87 = scmp.ne.s32.totalorder %s72, %s86
      %p88 = scmp.eq.s32.totalorder %s20, 0
      %p89 = por %p87, %p88
      %s91 = sadd.s32 %s90, 1
      %p94 = scmp.eq.s32.totalorder %s14, 1
      %p95 = scmp.ne.s32.totalorder %s90, %s92
      %p96 = scmp.eq.s32.totalorder %s14, 0
      %p97 = por %p95, %p96
      %p98 = scmp.ne.s32.totalorder %s90, %s92
      %p99 = scmp.eq.s32.totalorder %s19, 1
      %p100 = por %p98, %p99
      %p101 = scmp.ne.s32.totalorder %s92, %s93
      %p102 = scmp.eq.s32.totalorder %s19, 0
      %p103 = por %p101, %p102
      %p104 = scmp.ne.s32.totalorder %s92, %s93
      %p105 = scmp.eq.s32.totalorder %s20, 1
      %p106 = por %p104, %p105
      %p108 = scmp.ne.s32.totalorder %s93, %s107
      %p109 = scmp.eq.s32.totalorder %s20, 0
      %p110 = por %p108, %p109
      %s112 = sadd.s32 %s111, 1
      %p115 = scmp.eq.s32.totalorder %s14, 1
      %p116 = scmp.ne.s32.totalorder %s111, %s113
      %p117 = scmp.eq.s32.totalorder %s14, 0
      %p118 = por %p116, %p117
      %p119 = scmp.ne.s32.totalorder %s111, %s113
      %p120 = scmp.eq.s32.totalorder %s19, 1
      %p121 = por %p119, %p120
      %p122 = scmp.ne.s32.totalorder %s113, %s114
      %p123 = scmp.eq.s32.totalorder %s19, 0
      %p124 = por %p122, %p123
      %p125 = scmp.ne.s32.totalorder %s113, %s114
      %p126 = scmp.eq.s32.totalorder %s20, 1
      %p127 = por %p125, %p126
      %p129 = scmp.ne.s32.totalorder %s114, %s128
      %p130 = scmp.eq.s32.totalorder %s20, 0
      %p131 = por %p129, %p130
      %s133 = sadd.s32 %s132, 1
      %p136 = scmp.eq.s32.totalorder %s14, 1
      %p137 = scmp.ne.s32.totalorder %s132, %s134
      %p138 = scmp.eq.s32.totalorder %s14, 0
      %p139 = por %p137, %p138
      %p140 = scmp.ne.s32.totalorder %s132, %s134
      %p141 = scmp.eq.s32.totalorder %s19, 1
      %p142 = por %p140, %p141
      %p143 = scmp.ne.s32.totalorder %s134, %s135
      %p144 = scmp.eq.s32.totalorder %s19, 0
      %p145 = por %p143, %p144
      %p146 = scmp.ne.s32.totalorder %s134, %s135
      %p147 = scmp.eq.s32.totalorder %s20, 1
      %p148 = por %p146, %p147
      %p150 = scmp.ne.s32.totalorder %s135, %s149
      %p151 = scmp.eq.s32.totalorder %s20, 0
      %p152 = por %p150, %p151
      %s154 = sadd.s32 %s153, 1
      %p157 = scmp.eq.s32.totalorder %s14, 1
      %p158 = scmp.ne.s32.totalorder %s153, %s155
      %p159 = scmp.eq.s32.totalorder %s14, 0
      %p160 = por %p158, %p159
      %p161 = scmp.ne.s32.totalorder %s153, %s155
      %p162 = scmp.eq.s32.totalorder %s19, 1
      %p163 = por %p161, %p162
      %p164 = scmp.ne.s32.totalorder %s155, %s156
      %p165 = scmp.eq.s32.totalorder %s19, 0
      %p166 = por %p164, %p165
      %p167 = scmp.ne.s32.totalorder %s155, %s156
      %p168 = scmp.eq.s32.totalorder %s20, 1
      %p169 = por %p167, %p168
      %p171 = scmp.ne.s32.totalorder %s156, %s170
      %p172 = scmp.eq.s32.totalorder %s20, 0
      %p173 = por %p171, %p172
      %s175 = sadd.s32 %s174, 1
      %p178 = scmp.eq.s32.totalorder %s14, 1
      %p179 = scmp.ne.s32.totalorder %s174, %s176
      %p180 = scmp.eq.s32.totalorder %s14, 0
      %p181 = por %p179, %p180
      %p182 = scmp.ne.s32.totalorder %s174, %s176
      %p183 = scmp.eq.s32.totalorder %s19, 1
      %p184 = por %p182, %p183
      %p185 = scmp.ne.s32.totalorder %s176, %s177
      %p186 = scmp.eq.s32.totalorder %s19, 0
      %p187 = por %p185, %p186
      %p188 = scmp.ne.s32.totalorder %s176, %s177
      %p189 = scmp.eq.s32.totalorder %s20, 1
      %p190 = por %p188, %p189
      %p192 = scmp.ne.s32.totalorder %s177, %s191
      %p193 = scmp.eq.s32.totalorder %s20, 0
      %p194 = por %p192, %p193
      %s195 = ssub.s32 %s14, %s21
      %p196 = scmp.eq.s32.totalorder %s195, 0
      %s198 = sadd.s32 %s197, 1
      %s199 = scalar_select %p196, %s197, %s198
      %p202 = pneg %p196
      %p203 = scmp.eq.s32.totalorder %s14, 1
      %p204 = por %p202, %p203
      %p205 = scmp.ne.s32.totalorder %s197, %s200
      %p206 = scmp.eq.s32.totalorder %s14, 0
      %p207 = por %p205, %p206
      %p208 = scmp.ne.s32.totalorder %s197, %s200
      %p209 = scmp.eq.s32.totalorder %s19, 1
      %p210 = por %p208, %p209
      %p211 = scmp.ne.s32.totalorder %s200, %s201
      %p212 = scmp.eq.s32.totalorder %s19, 0
      %p213 = por %p211, %p212
      %p214 = scmp.ne.s32.totalorder %s200, %s201
      %p215 = scmp.eq.s32.totalorder %s20, 1
      %p216 = por %p214, %p215
      %p218 = scmp.ne.s32.totalorder %s201, %s217
      %p219 = scmp.eq.s32.totalorder %s20, 0
      %p220 = por %p218, %p219
      %p221 = scmp.le.s32.totalorder 1, %s14
      %p222 = scmp.lt.s32.totalorder %s14, 3
      %p223 = pnand %p221, %p222
      %p224 = pneg %p223
      // Predicated region
      $region9: #{dilated_res_block_proj.1} parent=5 // pred_check
        _
      $region10: #{dilated_res_block_proj.1} parent=5 // pred_check_branch
        %226 = sbr.rel (%p223) target = $region12
      $region11: #{dilated_res_block_proj.1} parent=5 // pred_region
        %s227 = ssub.s32 %s14, 1
        // Predicated region
        $region13: #{dilated_res_block_proj.1} parent=11 // pred_check
          %p228 = pneg %p61
        $region14: #{dilated_res_block_proj.1} parent=11 // pred_check_branch
          %230 = sbr.rel (%p228) target = $region16
        $region15: #{dilated_res_block_proj.1} parent=11 // pred_region
          _
        $region16: #{dilated_res_block_proj.1} parent=11 // pred_fallthru
          _
        // Predicated region
        $region17: #{dilated_res_block_proj.1} parent=11 // pred_check
          %p231 = pneg %p82
        $region18: #{dilated_res_block_proj.1} parent=11 // pred_check_branch
          %233 = sbr.rel (%p231) target = $region20
        $region19: #{dilated_res_block_proj.1} parent=11 // pred_region
          _
        $region20: #{dilated_res_block_proj.1} parent=11 // pred_fallthru
          _
        // Predicated region
        $region21: #{dilated_res_block_proj.1} parent=11 // pred_check
          %p234 = pneg %p103
        $region22: #{dilated_res_block_proj.1} parent=11 // pred_check_branch
          %236 = sbr.rel (%p234) target = $region24
        $region23: #{dilated_res_block_proj.1} parent=11 // pred_region
          _
        $region24: #{dilated_res_block_proj.1} parent=11 // pred_fallthru
          _
        // Predicated region
        $region25: #{dilated_res_block_proj.1} parent=11 // pred_check
          %p237 = pneg %p124
        $region26: #{dilated_res_block_proj.1} parent=11 // pred_check_branch
          %239 = sbr.rel (%p237) target = $region28
        $region27: #{dilated_res_block_proj.1} parent=11 // pred_region
          _
        $region28: #{dilated_res_block_proj.1} parent=11 // pred_fallthru
          _
        // Predicated region
        $region29: #{dilated_res_block_proj.1} parent=11 // pred_check
          %p240 = pneg %p145
        $region30: #{dilated_res_block_proj.1} parent=11 // pred_check_branch
          %242 = sbr.rel (%p240) target = $region32
        $region31: #{dilated_res_block_proj.1} parent=11 // pred_region
          _
        $region32: #{dilated_res_block_proj.1} parent=11 // pred_fallthru
          _
        // Predicated region
        $region33: #{dilated_res_block_proj.1} parent=11 // pred_check
          %p243 = pneg %p166
        $region34: #{dilated_res_block_proj.1} parent=11 // pred_check_branch
          %245 = sbr.rel (%p243) target = $region36
        $region35: #{dilated_res_block_proj.1} parent=11 // pred_region
          _
        $region36: #{dilated_res_block_proj.1} parent=11 // pred_fallthru
          _
        // Predicated region
        $region37: #{dilated_res_block_proj.1} parent=11 // pred_check
          %p246 = pneg %p187
        $region38: #{dilated_res_block_proj.1} parent=11 // pred_check_branch
          %248 = sbr.rel (%p246) target = $region40
        $region39: #{dilated_res_block_proj.1} parent=11 // pred_region
          _
        $region40: #{dilated_res_block_proj.1} parent=11 // pred_fallthru
          _
      $region12: #{dilated_res_block_proj.1} parent=5 // pred_fallthru
        _
      %p249 = scmp.lt.s32.totalorder %s14, 2
      // Predicated region
      $region41: #{dilated_res_block_proj.1} parent=5 // pred_check
        %p250 = pneg %p249
      $region42: #{dilated_res_block_proj.1} parent=5 // pred_check_branch
        %252 = sbr.rel (%p250) target = $region44
      $region43: #{dilated_res_block_proj.1} parent=5 // pred_region
        // Predicated region
        $region45: #{dilated_res_block_proj.1} parent=43 // pred_check
          %p253 = pneg %p34
        $region46: #{dilated_res_block_proj.1} parent=43 // pred_check_branch
          %255 = sbr.rel (%p253) target = $region48
        $region47: #{dilated_res_block_proj.1} parent=43 // pred_region
          %s256 = smul.u32 2, %s14
          %p257 = scmp.lt.s32.totalorder %s256, 3
          %s258 = scalar_select %p257, %s256, 3
          %s259 = smul.addr %s258, 2
          %s260 = scalar_lea.vmem %s0, %s259
          %s261 = smul.u32 2, %s14
        $region48: #{dilated_res_block_proj.1} parent=43 // pred_fallthru
          _
      $region44: #{dilated_res_block_proj.1} parent=5 // pred_fallthru
        _
      %p262 = scmp.le.s32.totalorder 1, %s14
      %p263 = scmp.lt.s32.totalorder %s14, 3
      %p264 = pnand %p262, %p263
      %p265 = pneg %p264
      // Predicated region
      $region49: #{dilated_res_block_proj.1} parent=5 // pred_check
        _
      $region50: #{dilated_res_block_proj.1} parent=5 // pred_check_branch
        %267 = sbr.rel (%p264) target = $region52
      $region51: #{dilated_res_block_proj.1} parent=5 // pred_region
        %s268 = ssub.s32 %s14, 1
        %s269 = smul.u32 2, %s19
        %p270 = scmp.lt.s32.totalorder %s269, 3
        %s271 = scalar_select %p270, %s269, 3
        %s272 = smul.addr %s271, 2
        %s273 = scalar_lea.vmem %s0, %s272
        %p274 = pneg %p40
        %p275 = pneg %p37
        %p276 = pneg %p61
        %p277 = pneg %p58
        %p278 = pneg %p82
        %p279 = pneg %p79
        %p280 = pneg %p103
        %p281 = pneg %p100
        %p282 = pneg %p124
        %p283 = pneg %p121
        %p284 = pneg %p145
        %p285 = pneg %p142
        %p286 = pneg %p166
        %p287 = pneg %p163
        %p288 = pneg %p187
        %p289 = pneg %p184
        %p290 = pneg %p213
        %p291 = pneg %p210
        %s292 = sand.u32 %s200, 1
        %s293 = sand.u32 %s200, 1
        %s294 = smul.addr %s293, 32
        %s295 = scalar_lea.vmem [#allocation3], %s294
        %s296 = smul.u32 2, %s19
        %p297 = scmp.lt.s32.totalorder %s296, 3
        %s298 = scalar_select %p297, %s296, 3
        %s299 = smul.addr %s298, 2
        %s300 = scalar_lea.vmem %s0, %s299
        %s301 = smul.u32 2, %s19
        %s302 = smul.u32 2, %s19
        %v304 = vld [vmem:[%s1] sm:$0xf]
        %v305 = vld [vmem:[%s1 + $0x4] sm:$0xf]
        %v306 = vld [vmem:[%s1 + $0x8] sm:$0xf]
        %v307 = vld [vmem:[%s300] sm:$0xf]
        %v311 = vunpack.c.l.b16 %v304
        %v312 = vunpack.c.l.b16 %v305
        %v313 = vunpack.c.l.b16 %v306
        %v314 = vpack.c.b16 %v312, %v311
        %v315 = vpack.c.b16 %v313, %v313
        %317 = vst [vmem:[#allocation1] ss:$4 sm:$0xff] %v307
        %v318 = vld.sshfl [vmem:[#allocation1] sm:$0xff pattern:$0x73625140]
        %v319 = vld.sshfl [vmem:[#allocation1 + $0x8] sm:$0xff pattern:$0x73625140]
        %vm320 = vcmask 31744
        %v322 = vsel %vm320, %v314, 0
        %v325 = vsel %vm320, %v315, 0
        %vm327 = vcmask 1041408
        %v328 = vsel %vm327, %v318, 0
        %v330 = vsel %vm327, %v319, 0
        %332 = vmatpush.bf16.msra.mxu0 0
        %333 = vmatpush.bf16.msra.mxu0 0
        %334 = vmatpush.bf16.msra.mxu0 0
        %335 = vmatpush.bf16.msra.mxu0 0
        %336 = vmatpush.bf16.msra.mxu0 0
        %337 = vmatpush.bf16.msra.mxu0 0
        %338 = vmatpush.bf16.msra.mxu0 0
        %339 = vmatpush.bf16.msra.mxu0 %v328
        %340 = vmatmul.bf16.gmra.mxu0 %v322
        %v341 = vpop.f32.mrf.mxu0
        %v342 = vadd.f32 0.0, %v341
        %v343 = vpop.f32.mrf.mxu0
        %v344 = vadd.f32 0.0, %v343
        %345 = vmatmul.bf16.gmra.mxu0 %v325
        %v346 = vpop.f32.mrf.mxu0
        %v347 = vadd.f32 0.0, %v346
        %v348 = vpop.f32.mrf.mxu0
        %349 = vdwg.mxu0
        %350 = vmatpush.bf16.msra.mxu0 0
        %351 = vmatpush.bf16.msra.mxu0 0
        %352 = vmatpush.bf16.msra.mxu0 0
        %353 = vmatpush.bf16.msra.mxu0 0
        %354 = vmatpush.bf16.msra.mxu0 0
        %355 = vmatpush.bf16.msra.mxu0 0
        %356 = vmatpush.bf16.msra.mxu0 0
        %357 = vmatpush.bf16.msra.mxu0 %v330
        %358 = vmatmul.bf16.gmra.mxu0 %v322
        %v359 = vpop.f32.mrf.mxu0
        %v360 = vadd.f32 0.0, %v359
        %v361 = vpop.f32.mrf.mxu0
        %v362 = vadd.f32 0.0, %v361
        %363 = vmatmul.bf16.gmra.mxu0 %v325
        %v364 = vpop.f32.mrf.mxu0
        %v365 = vadd.f32 0.0, %v364
        %v366 = vpop.f32.mrf.mxu0
        %367 = vdwg.mxu0
        %v368 = vld [vmem:[%s2] sm:$0xff]
        %370 = vset.pattern.permute.xlu0 0
        %371 = vperm.xlu0 %370, %v368
        %v372 = vpop.permute.xlu0 %371
        %v374 = vadd.f32 %v342, %v372
        %v375 = vadd.f32 %v360, %v372
        %v376 = vmax.f32 %v374, 0.0
        %v377 = vmax.f32 %v375, 0.0
        %378 = vst [vmem:[%s295] sm:$0xff] %v344
        %379 = vst [vmem:[%s295 + $0x8] sm:$0xff] %v362
        %380 = vst [vmem:[%s295 + $0x10] sm:$0xff] %v347
        %381 = vst [vmem:[%s295 + $0x18] sm:$0xff] %v365
        %382 = vrot.lane.b32.xlu0 %v376, 34
        %v383 = vpop.permute.xlu0 %382
        %384 = vrot.lane.b32.xlu0 %v377, 34
        %v385 = vpop.permute.xlu0 %384
        %v386 = vlaneseq
        %v387 = vand.u32 %v386, 127
        %vm388 = vcmp.lt.s32.totalorder %v387, 34
        %v389 = vsel %vm388, %v383, %v385
        %v390 = vsel %vm388, %v385, %v383
        %v391 = vld [vmem:[%s7] ss:$8 sm:$0x3]
        %v393 = vperm.slane %v391, 0
        %v394 = vperm.slane %v391, 1
        %v397 = vmul.f32 %v390, %v393
        %v398 = vmul.f32 %v389, %v394
        %399 = vst [vmem:[#allocation2] sm:$0xff] %v397
        %400 = vst [vmem:[#allocation2 + $0x8] sm:$0xff] %v398
        %401 = vrot.lane.b32.xlu0 %v376, 32
        %v402 = vpop.permute.xlu0 %401
        %403 = vrot.lane.b32.xlu0 %v377, 32
        %v404 = vpop.permute.xlu0 %403
        %vm405 = vcmp.lt.s32.totalorder %v387, 32
        %v406 = vsel %vm405, %v402, %v404
        %v407 = vsel %vm405, %v404, %v402
        %s408 = scalar_lea.vmem %s7, 1
        %v409 = vld [vmem:[%s408] ss:$8 sm:$0x3]
        %v411 = vperm.slane %v409, 0
        %v412 = vperm.slane %v409, 1
        %v415 = vmul.f32 %v407, %v411
        %v416 = vmul.f32 %v406, %v412
        %417 = vst [vmem:[#allocation2 + $0x10] sm:$0xff] %v415
        %418 = vst [vmem:[#allocation2 + $0x18] sm:$0xff] %v416
        %419 = vrot.lane.b32.xlu0 %v376, 30
        %v420 = vpop.permute.xlu0 %419
        %421 = vrot.lane.b32.xlu0 %v377, 30
        %v422 = vpop.permute.xlu0 %421
        %vm423 = vcmp.lt.s32.totalorder %v387, 30
        %v424 = vsel %vm423, %v420, %v422
        %v425 = vsel %vm423, %v422, %v420
        %s426 = scalar_lea.vmem %s7, 2
        %v427 = vld [vmem:[%s426] ss:$8 sm:$0x3]
        %v429 = vperm.slane %v427, 0
        %v430 = vperm.slane %v427, 1
        %v433 = vmul.f32 %v425, %v429
        %v434 = vmul.f32 %v424, %v430
        %435 = vst [vmem:[#allocation2 + $0x20] sm:$0xff] %v433
        %436 = vst [vmem:[#allocation2 + $0x28] sm:$0xff] %v434
        %437 = vrot.lane.b32.xlu0 %v376, 2
        %v438 = vpop.permute.xlu0 %437
        %439 = vrot.lane.b32.xlu0 %v377, 2
        %v440 = vpop.permute.xlu0 %439
        %vm441 = vcmp.lt.s32.totalorder %v387, 2
        %v442 = vsel %vm441, %v438, %v440
        %v443 = vsel %vm441, %v440, %v438
        %s444 = scalar_lea.vmem %s7, 3
        %v445 = vld [vmem:[%s444] ss:$8 sm:$0x3]
        %v447 = vperm.slane %v445, 0
        %v448 = vperm.slane %v445, 1
        %v451 = vmul.f32 %v443, %v447
        %v452 = vmul.f32 %v442, %v448
        %453 = vst [vmem:[#allocation2 + $0x30] sm:$0xff] %v451
        %454 = vst [vmem:[#allocation2 + $0x38] sm:$0xff] %v452
        %s455 = scalar_lea.vmem %s7, 4
        %v456 = vld [vmem:[%s455] ss:$8 sm:$0x3]
        %v458 = vperm.slane %v456, 0
        %v459 = vperm.slane %v456, 1
        %v462 = vmul.f32 %v376, %v458
        %v463 = vmul.f32 %v377, %v459
        %464 = vst [vmem:[#allocation2 + $0x40] sm:$0xff] %v462
        %465 = vst [vmem:[#allocation2 + $0x48] sm:$0xff] %v463
        %466 = vrot.lane.b32.xlu0 %v376, 126
        %v467 = vpop.permute.xlu0 %466
        %468 = vrot.lane.b32.xlu0 %v377, 126
        %v469 = vpop.permute.xlu0 %468
        %vm470 = vcmp.lt.s32.totalorder %v387, 126
        %v471 = vsel %vm470, %v467, %v469
        %v472 = vsel %vm470, %v469, %v467
        %s473 = scalar_lea.vmem %s7, 5
        %v474 = vld [vmem:[%s473] ss:$8 sm:$0x3]
        %v476 = vperm.slane %v474, 0
        %v477 = vperm.slane %v474, 1
        %v480 = vmul.f32 %v471, %v476
        %v481 = vmul.f32 %v472, %v477
        %482 = vst [vmem:[#allocation2 + $0x50] sm:$0xff] %v480
        %483 = vst [vmem:[#allocation2 + $0x58] sm:$0xff] %v481
        %484 = vrot.lane.b32.xlu0 %v376, 98
        %v485 = vpop.permute.xlu0 %484
        %486 = vrot.lane.b32.xlu0 %v377, 98
        %v487 = vpop.permute.xlu0 %486
        %vm488 = vcmp.lt.s32.totalorder %v387, 98
        %v489 = vsel %vm488, %v485, %v487
        %v490 = vsel %vm488, %v487, %v485
        %s491 = scalar_lea.vmem %s7, 6
        %v492 = vld [vmem:[%s491] ss:$8 sm:$0x3]
        %v494 = vperm.slane %v492, 0
        %v495 = vperm.slane %v492, 1
        %v498 = vmul.f32 %v489, %v494
        %v499 = vmul.f32 %v490, %v495
        %500 = vst [vmem:[#allocation2 + $0x60] sm:$0xff] %v498
        %501 = vst [vmem:[#allocation2 + $0x68] sm:$0xff] %v499
        %502 = vrot.lane.b32.xlu0 %v376, 96
        %v503 = vpop.permute.xlu0 %502
        %504 = vrot.lane.b32.xlu0 %v377, 96
        %v505 = vpop.permute.xlu0 %504
        %vm506 = vcmp.lt.s32.totalorder %v387, 96
        %v507 = vsel %vm506, %v503, %v505
        %v508 = vsel %vm506, %v505, %v503
        %s509 = scalar_lea.vmem %s7, 7
        %v510 = vld [vmem:[%s509] ss:$8 sm:$0x3]
        %v512 = vperm.slane %v510, 0
        %v513 = vperm.slane %v510, 1
        %v516 = vmul.f32 %v507, %v512
        %v517 = vmul.f32 %v508, %v513
        %518 = vst [vmem:[#allocation2 + $0x70] sm:$0xff] %v516
        %519 = vst [vmem:[#allocation2 + $0x78] sm:$0xff] %v517
        %520 = vrot.lane.b32.xlu0 %v376, 94
        %v521 = vpop.permute.xlu0 %520
        %522 = vrot.lane.b32.xlu0 %v377, 94
        %v523 = vpop.permute.xlu0 %522
        %vm524 = vcmp.lt.s32.totalorder %v387, 94
        %v525 = vsel %vm524, %v521, %v523
        %v526 = vsel %vm524, %v523, %v521
        %s527 = scalar_lea.vmem %s7, 16
        %v528 = vld [vmem:[%s527] ss:$8 sm:$0x3]
        %v530 = vperm.slane %v528, 0
        %v531 = vperm.slane %v528, 1
        %v534 = vmul.f32 %v525, %v530
        %v535 = vmul.f32 %v526, %v531
        %536 = vst [vmem:[#allocation2 + $0x80] sm:$0xff] %v534
        %537 = vst [vmem:[#allocation2 + $0x88] sm:$0xff] %v535
        %v538 = vld [vmem:[%s3] sm:$0xf]
        %v539 = vld [vmem:[%s3 + $0x4] sm:$0xf]
        %v540 = vld [vmem:[#allocation2] sm:$0xff]
        %v541 = vld [vmem:[#allocation2 + $0x8] sm:$0xff]
        %v542 = vld [vmem:[#allocation2 + $0x10] sm:$0xff]
        %v543 = vld [vmem:[#allocation2 + $0x18] sm:$0xff]
        %v544 = vld [vmem:[#allocation2 + $0x20] sm:$0xff]
        %v545 = vld [vmem:[#allocation2 + $0x28] sm:$0xff]
        %v546 = vld [vmem:[#allocation2 + $0x30] sm:$0xff]
        %v547 = vld [vmem:[#allocation2 + $0x38] sm:$0xff]
        %v548 = vld [vmem:[#allocation2 + $0x40] sm:$0xff]
        %v549 = vld [vmem:[#allocation2 + $0x48] sm:$0xff]
        %v550 = vld [vmem:[#allocation2 + $0x50] sm:$0xff]
        %v551 = vld [vmem:[#allocation2 + $0x58] sm:$0xff]
        %v552 = vld [vmem:[#allocation2 + $0x60] sm:$0xff]
        %v553 = vld [vmem:[#allocation2 + $0x68] sm:$0xff]
        %v554 = vld [vmem:[#allocation2 + $0x70] sm:$0xff]
        %v555 = vld [vmem:[#allocation2 + $0x78] sm:$0xff]
        %v556 = vld [vmem:[#allocation2 + $0x80] sm:$0xff]
        %v557 = vld [vmem:[#allocation2 + $0x88] sm:$0xff]
        %v558 = vpack.c.bf16 %v542, %v540
        %v559 = vpack.c.bf16 %v543, %v541
        %v560 = vpack.c.bf16 %v546, %v544
        %v561 = vpack.c.bf16 %v547, %v545
        %v562 = vpack.c.bf16 %v550, %v548
        %v563 = vpack.c.bf16 %v551, %v549
        %v564 = vpack.c.bf16 %v554, %v552
        %v565 = vpack.c.bf16 %v555, %v553
        %v566 = vpack.c.bf16 %v556, %v556
        %v567 = vpack.c.bf16 %v557, %v557
        %v568 = vld [vmem:[%s4] sm:$0xff]
        %v569 = vld [vmem:[%s4 + $0x8] sm:$0xff]
        %571 = vset.pattern.permute.xlu0 0
        %572 = vperm.xlu0 %571, %v568
        %v573 = vpop.permute.xlu0 %572
        %576 = vset.pattern.permute.xlu0 0
        %577 = vperm.xlu0 %576, %v569
        %v578 = vpop.permute.xlu0 %577
        %v582 = vunpack.c.l.b16 %v538
        %v583 = vunpack.c.l.b16 %v539
        %v584 = vpack.c.b16 %v583, %v582
        %vm585 = vcmask 588800
        %v587 = vsel %vm585, %v584, 0
        %vm589 = vcmask 1043456
        %v591 = vsel %vm589, %v566, 0
        %v594 = vsel %vm589, %v567, 0
        %596 = vmatpush.bf16.msra.mxu0 0
        %597 = vmatpush.bf16.msra.mxu0 0
        %598 = vmatpush.bf16.msra.mxu0 0
        %599 = vmatpush.bf16.msra.mxu0 %v591
        %600 = vmatpush.bf16.msra.mxu0 %v564
        %601 = vmatpush.bf16.msra.mxu0 %v562
        %602 = vmatpush.bf16.msra.mxu0 %v560
        %603 = vmatpush.bf16.msra.mxu0 %v558
        %604 = vmatmul.bf16.gmra.mxu0 %v587
        %v605 = vpop.f32.mrf.mxu0
        %v606 = vadd.f32 %v573, %v605
        %v607 = vpop.f32.mrf.mxu0
        %v608 = vadd.f32 %v578, %v607
        %609 = vdwg.mxu0
        %610 = vmatpush.bf16.msra.mxu0 0
        %611 = vmatpush.bf16.msra.mxu0 0
        %612 = vmatpush.bf16.msra.mxu0 0
        %613 = vmatpush.bf16.msra.mxu0 %v594
        %614 = vmatpush.bf16.msra.mxu0 %v565
        %615 = vmatpush.bf16.msra.mxu0 %v563
        %616 = vmatpush.bf16.msra.mxu0 %v561
        %617 = vmatpush.bf16.msra.mxu0 %v559
        %618 = vmatmul.bf16.gmra.mxu0 %v587
        %v619 = vpop.f32.mrf.mxu0
        %v620 = vadd.f32 %v573, %v619
        %v621 = vpop.f32.mrf.mxu0
        %v622 = vadd.f32 %v578, %v621
        %623 = vdwg.mxu0
        %v624 = vmax.f32 %v606, 0.0
        %v625 = vmax.f32 %v620, 0.0
        %v626 = vmax.f32 %v608, 0.0
        %v627 = vmax.f32 %v622, 0.0
        %v628 = vld [vmem:[%s5] sm:$0xf]
        %v629 = vld [vmem:[%s5 + $0x4] sm:$0xf]
        %v630 = vpack.c.bf16 %v626, %v624
        %v631 = vpack.c.bf16 %v627, %v625
        %v632 = vld [vmem:[%s295] sm:$0xff]
        %v633 = vld [vmem:[%s295 + $0x8] sm:$0xff]
        %v634 = vld [vmem:[%s295 + $0x10] sm:$0xff]
        %v635 = vld [vmem:[%s295 + $0x18] sm:$0xff]
        %v638 = vunpack.c.l.b16 %v628
        %v639 = vunpack.c.l.b16 %v629
        %v640 = vpack.c.b16 %v639, %v638
        %vm641 = vcmask 130048
        %v643 = vsel %vm641, %v640, 0
        %645 = vmatpush.bf16.msra.mxu0 0
        %646 = vmatpush.bf16.msra.mxu0 0
        %647 = vmatpush.bf16.msra.mxu0 0
        %648 = vmatpush.bf16.msra.mxu0 0
        %649 = vmatpush.bf16.msra.mxu0 0
        %650 = vmatpush.bf16.msra.mxu0 0
        %651 = vmatpush.bf16.msra.mxu0 0
        %652 = vmatpush.bf16.msra.mxu0 %v630
        %653 = vmatmul.bf16.gmra.mxu0 %v643
        %v654 = vpop.f32.mrf.mxu0
        %v655 = vadd.f32 %v632, %v654
        %v656 = vpop.f32.mrf.mxu0
        %v657 = vadd.f32 %v634, %v656
        %658 = vdwg.mxu0
        %659 = vmatpush.bf16.msra.mxu0 0
        %660 = vmatpush.bf16.msra.mxu0 0
        %661 = vmatpush.bf16.msra.mxu0 0
        %662 = vmatpush.bf16.msra.mxu0 0
        %663 = vmatpush.bf16.msra.mxu0 0
        %664 = vmatpush.bf16.msra.mxu0 0
        %665 = vmatpush.bf16.msra.mxu0 0
        %666 = vmatpush.bf16.msra.mxu0 %v631
        %667 = vmatmul.bf16.gmra.mxu0 %v643
        %v668 = vpop.f32.mrf.mxu0
        %v669 = vadd.f32 %v633, %v668
        %v670 = vpop.f32.mrf.mxu0
        %v671 = vadd.f32 %v635, %v670
        %672 = vdwg.mxu0
        %v673 = vld [vmem:[%s6] sm:$0xff]
        %v674 = vld [vmem:[%s6 + $0x8] sm:$0xff]
        %676 = vset.pattern.permute.xlu0 0
        %677 = vperm.xlu0 %676, %v673
        %v678 = vpop.permute.xlu0 %677
        %681 = vset.pattern.permute.xlu0 0
        %682 = vperm.xlu0 %681, %v674
        %v683 = vpop.permute.xlu0 %682
        %v685 = vadd.f32 %v655, %v678
        %v686 = vadd.f32 %v669, %v678
        %v687 = vadd.f32 %v657, %v683
        %v688 = vadd.f32 %v671, %v683
        %v689 = vmax.f32 %v685, 0.0
        %v690 = vmax.f32 %v686, 0.0
        %v691 = vmax.f32 %v687, 0.0
        %v692 = vmax.f32 %v688, 0.0
        %693 = vst [vmem:[%s295] sm:$0xff] %v689
        %694 = vst [vmem:[%s295 + $0x8] sm:$0xff] %v690
        %695 = vst [vmem:[%s295 + $0x10] sm:$0xff] %v691
        %696 = vst [vmem:[%s295 + $0x18] sm:$0xff] %v692
        %s697 = sand.u32 %s200, 1
        %s698 = sand.u32 %s200, 1
        %s699 = smul.addr %s698, 32
        %s700 = scalar_lea.vmem [#allocation3], %s699
        // Predicated region
        $region53: #{dilated_res_block_proj.1} parent=51 // pred_check
          %p701 = pneg %p210
        $region54: #{dilated_res_block_proj.1} parent=51 // pred_check_branch
          %703 = sbr.rel (%p701) target = $region56
        $region55: #{dilated_res_block_proj.1} parent=51 // pred_region
          %s704 = smul.u32 2, %s19
          %s705 = smul.addr %s704, 8
          %s706 = scalar_lea.vmem %s8, %s705
          // Predicated region
          $region57: #{dilated_res_block_proj.1} parent=55 // pred_check
            _
          $region58: #{dilated_res_block_proj.1} parent=55 // pred_check_branch
            %708 = sbr.rel (0) target = $region60
          $region59: #{dilated_res_block_proj.1} parent=55 // pred_region
            // Predicated region
            $region61: #{dilated_res_block_proj.1} parent=59 // pred_check
              _
            $region62: #{dilated_res_block_proj.1} parent=59 // pred_check_branch
              %710 = sbr.rel (0) target = $region64
            $region63: #{dilated_res_block_proj.1} parent=59 // pred_region
              loop: start=0, step=1, limit=1
              $region65: #{dilated_res_block_proj.1} parent=63 // loop_pre_header
                _
              $region66: #{dilated_res_block_proj.1} parent=63 // loop_header
                %s712 = sphi 0, %s716
                %p713 = scmp.ge.s32.totalorder %s712, 1
                %s717 = sphi %s700, %s700
                %s718 = sphi %s706, %s706
              $region67: #{dilated_res_block_proj.1} parent=63 // loop_header_branch
                %715 = sbr.rel (%p713) target = $region71
              $region68: #{dilated_res_block_proj.1} parent=63 // loop_body
                %v719 = vld [vmem:[%s717] sm:$0xff]
                %720 = vst [vmem:[%s718] sm:$0xff] %v719
                %v721 = vld [vmem:[%s717 + $0x8] sm:$0xff]
                %722 = vst [vmem:[%s718 + $0x8] sm:$0xff] %v721
                %v723 = vld [vmem:[%s717 + $0x10] sm:$0xff]
                %724 = vst [vmem:[%s718 + $0x20] sm:$0xff] %v723
                %v725 = vld [vmem:[%s717 + $0x18] sm:$0xff]
                %726 = vst [vmem:[%s718 + $0x28] sm:$0xff] %v725
              $region69: #{dilated_res_block_proj.1} parent=63 // loop_footer
                %s716 = sadd.s32 1, %s712
              $region70: #{dilated_res_block_proj.1} parent=63 // loop_footer_branch
                %711 = sbr.rel target = $region66
              $region71: #{dilated_res_block_proj.1} parent=63 // loop_exit
                _
            $region64: #{dilated_res_block_proj.1} parent=59 // pred_fallthru
              _
            // Predicated region
            $region72: #{dilated_res_block_proj.1} parent=59 // pred_check
              _
            $region73: #{dilated_res_block_proj.1} parent=59 // pred_check_branch
              %728 = sbr.rel target = $region75
            $region74: #{dilated_res_block_proj.1} parent=59 // pred_region
              _
            $region75: #{dilated_res_block_proj.1} parent=59 // pred_fallthru
              _
          $region60: #{dilated_res_block_proj.1} parent=55 // pred_fallthru
            _
          %729 = vnop
        $region56: #{dilated_res_block_proj.1} parent=51 // pred_fallthru
          _
      $region52: #{dilated_res_block_proj.1} parent=5 // pred_fallthru
        _
      %p730 = scmp.le.s32.totalorder 2, %s14
      // Predicated region
      $region76: #{dilated_res_block_proj.1} parent=5 // pred_check
        %p731 = pneg %p730
      $region77: #{dilated_res_block_proj.1} parent=5 // pred_check_branch
        %733 = sbr.rel (%p731) target = $region79
      $region78: #{dilated_res_block_proj.1} parent=5 // pred_region
        %s734 = ssub.s32 %s14, 2
        // Predicated region
        $region80: #{dilated_res_block_proj.1} parent=78 // pred_check
          %p735 = pneg %p216
        $region81: #{dilated_res_block_proj.1} parent=78 // pred_check_branch
          %737 = sbr.rel (%p735) target = $region83
        $region82: #{dilated_res_block_proj.1} parent=78 // pred_region
          %s738 = sand.u32 %s201, 1
          %s739 = sand.u32 %s201, 1
          %s740 = smul.addr %s739, 32
          %s741 = scalar_lea.vmem [#allocation3], %s740
        $region83: #{dilated_res_block_proj.1} parent=78 // pred_fallthru
          _
      $region79: #{dilated_res_block_proj.1} parent=5 // pred_fallthru
        _
    $region6: #{dilated_res_block_proj.1} parent=1 // loop_footer
      %s18 = sadd.s32 1, %s14
    $region7: #{dilated_res_block_proj.1} parent=1 // loop_footer_branch
      %13 = sbr.rel target = $region3
    $region8: #{dilated_res_block_proj.1} parent=1 // loop_exit
      _

</llo_original>
